<compile_context>
chip_gen: v6e
topology: v6e:2x2x1
jax: 0.10.0
libtpu: 0.0.40
codegen_flags: <defaults>
</compile_context>

<pallas_src>
from functools import partial
from typing import NamedTuple

import jax
import jax.numpy as jnp
from jax.experimental import pallas as pl
from jax.experimental.pallas import tpu as pltpu

MAX_TM, MAX_TN, MAX_TK = 256, 256, 4608
BN_EPS = 1e-5


def _ceil_to(v, m):
    return -(-v // m) * m


def _kn_tiles(K, N):
    """K/N tiling + padding for a (K,N) weight matrix.  Independent of M by construction
    (weights are prepadded with exactly these Kp/Np)."""
    ks = max(1, -(-_ceil_to(K, 128) // MAX_TK))      # number of k steps (1 for all of ResNet50)
    TK = _ceil_to(-(-K // ks), 128)
    Kp = TK * ks
    TN = min(MAX_TN, _ceil_to(N, 128))               # lane-dense multiples of 128, up to 256
    Np = _ceil_to(N, TN)
    return TK, Kp, ks, TN, Np


def _m_tiles(M):
    """M (sublane axis) tiling: do not pad tiny M up to a full 256-row tile."""
    TM = min(MAX_TM, _ceil_to(M, 16))
    Mp = _ceil_to(M, TM)
    return TM, Mp


# ----------------------------------------------------------------------------- kernels
def _mm_kernel(x_ref, w_ref, b_ref, *rest, relu, fuse_res, single_k):
    """Tiled matmul; epilogue = +bias (folded BN) [+ residual] [+ ReLU]. bf16 in, f32 acc."""
    idx = 0
    r_ref = None
    if fuse_res:
        r_ref = rest[0]
        idx = 1
    if single_k:
        o_ref = rest[idx]
        acc_ref = None
    else:
        o_ref, acc_ref = rest[idx], rest[idx + 1]

    def _epilogue(acc):
        y = acc + b_ref[...]
        if fuse_res:
            y = y + r_ref[...].astype(jnp.float32)
        if relu:
            y = jnp.maximum(y, 0.0)
        o_ref[...] = y.astype(o_ref.dtype)

    if single_k:
        _epilogue(jnp.dot(x_ref[...], w_ref[...], preferred_element_type=jnp.float32))
    else:
        @pl.when(pl.program_id(2) == 0)
        def _():
            acc_ref[...] = jnp.zeros_like(acc_ref)

        acc_ref[...] += jnp.dot(x_ref[...], w_ref[...], preferred_element_type=jnp.float32)

        @pl.when(pl.program_id(2) == pl.num_programs(2) - 1)
        def _():
            _epilogue(acc_ref[...])


def _avgpool_kernel(x_ref, o_ref):
    # x: (N, H*W, C) bf16 (single block) -> mean over spatial, f32 out
    o_ref[...] = jnp.mean(x_ref[...].astype(jnp.float32), axis=1, keepdims=True)


# ----------------------------------------------------------------------------- pallas wrappers
def matmul_bias_act(cols, w, b, K, N, relu, residual=None):
    """cols:(M,Kp) bf16 (K already zero-padded) @ w:(Kp,Np) bf16 (BN folded, prepadded)
    + bias; optional fused residual-add + ReLU in the epilogue."""
    M = cols.shape[0]
    TK, Kp, ks, TN, Np = _kn_tiles(K, N)
    TM, Mp = _m_tiles(M)
    assert cols.shape == (M, Kp), (cols.shape, M, Kp)
    assert w.shape == (Kp, Np), (w.shape, Kp, Np)

    x = cols.astype(jnp.bfloat16)
    if Mp != M:
        x = jnp.pad(x, ((0, Mp - M), (0, 0)))

    fuse_res = residual is not None
    single_k = ks == 1

    if single_k:
        grid = (Mp // TM, Np // TN)
        x_map = lambda i, j: (i, 0)
        w_map = lambda i, j: (0, j)
        b_map = lambda i, j: (0, j)
        o_map = lambda i, j: (i, j)
        dims = ("parallel", "parallel")
        scratch = ()
    else:
        grid = (Mp // TM, Np // TN, ks)
        x_map = lambda i, j, k: (i, k)
        w_map = lambda i, j, k: (k, j)
        b_map = lambda i, j, k: (0, j)
        o_map = lambda i, j, k: (i, j)
        dims = ("parallel", "parallel", "arbitrary")
        scratch = (pltpu.VMEM((TM, TN), jnp.float32),)

    in_specs = [
        pl.BlockSpec((TM, TK), x_map),
        pl.BlockSpec((TK, TN), w_map),
        pl.BlockSpec((1, TN), b_map),
    ]
    args = [x, w, b]
    if fuse_res:
        r = residual.astype(jnp.bfloat16)
        if r.shape != (Mp, Np):
            r = jnp.pad(r, ((0, Mp - r.shape[0]), (0, Np - r.shape[1])))
        in_specs.append(pl.BlockSpec((TM, TN), o_map))
        args.append(r)

    out = pl.pallas_call(
        partial(_mm_kernel, relu=relu, fuse_res=fuse_res, single_k=single_k),
        out_shape=jax.ShapeDtypeStruct((Mp, Np), jnp.bfloat16),
        grid_spec=pltpu.PrefetchScalarGridSpec(
            num_scalar_prefetch=0,
            grid=grid,
            in_specs=in_specs,
            out_specs=pl.BlockSpec((TM, TN), o_map),
            scratch_shapes=scratch,
        ),
        compiler_params=pltpu.CompilerParams(
            dimension_semantics=dims,
            vmem_limit_bytes=32 * 1024 * 1024,
        ),
    )(*args)
    if (Mp, Np) != (M, N):
        out = out[:M, :N]
    return out


class ConvCfg(NamedTuple):
    kh: int
    kw: int
    stride: int
    pad: int
    cin: int
    cout: int


@partial(jax.jit, static_argnames=("cfg", "relu"))
def conv_bn_act(x, w, b, residual, *, cfg, relu):
    """Conv(NHWC) + folded BN + optional fused residual-add + ReLU via im2col + Pallas matmul.
    K padding is folded into the im2col construction (explicit zeros, so no NaN*0 hazard)."""
    n, h, wd, cin = x.shape
    kh, kw, stride, pad = cfg.kh, cfg.kw, cfg.stride, cfg.pad
    oh = (h + 2 * pad - kh) // stride + 1
    ow = (wd + 2 * pad - kw) // stride + 1
    K = kh * kw * cin
    _, Kp, _, _, _ = _kn_tiles(K, cfg.cout)
    if kh == 1 and kw == 1 and pad == 0:
        cols = x if stride == 1 else x[:, ::stride, ::stride, :]
        cols = cols.reshape(n * oh * ow, cin)
        if Kp != K:
            cols = jnp.pad(cols, ((0, 0), (0, Kp - K)))
    else:
        xp = jnp.pad(x, ((0, 0), (pad, pad), (pad, pad), (0, 0)))
        taps = [
            xp[:, di:di + stride * oh:stride, dj:dj + stride * ow:stride, :]
            for di in range(kh) for dj in range(kw)
        ]
        if Kp != K:
            taps.append(jnp.zeros((n, oh, ow, Kp - K), x.dtype))
        cols = jnp.concatenate(taps, axis=-1).reshape(n * oh * ow, Kp)
    res = None if residual is None else residual.reshape(n * oh * ow, cfg.cout)
    out = matmul_bias_act(cols, w, b, K=K, N=cfg.cout, relu=relu, residual=res)
    return out.reshape(n, oh, ow, cfg.cout)


@jax.jit
def maxpool3x3_s2(x):
    """MaxPool2d(kernel=3, stride=2, padding=1) on NHWC as a fused max-tree (no 9x stack)."""
    n, h, w, c = x.shape
    oh = (h + 2 - 3) // 2 + 1
    ow = (w + 2 - 3) // 2 + 1
    xp = jnp.pad(x, ((0, 0), (1, 1), (1, 1), (0, 0)), constant_values=-jnp.inf)
    out = None
    for di in range(3):
        for dj in range(3):
            v = xp[:, di:di + 2 * oh:2, dj:dj + 2 * ow:2, :]
            out = v if out is None else jnp.maximum(out, v)
    return out


@jax.jit
def global_avgpool(x):
    """AdaptiveAvgPool2d((1,1)) on NHWC -> (N, C) float32, single Pallas block (grid=())."""
    n, h, w, c = x.shape
    x2 = x.reshape(n, h * w, c)
    out = pl.pallas_call(
        _avgpool_kernel,
        out_shape=jax.ShapeDtypeStruct((n, 1, c), jnp.float32),
    )(x2)
    return out.reshape(n, c)


# ----------------------------------------------------------------------------- parameters
def _conv_params(key, cin, cout, kh, kw, stride, pad):
    """He-init conv + identity BN, folded into a prepadded bf16 weight matrix and f32 bias."""
    fan_in = cin * kh * kw
    w = jax.random.normal(key, (cout, cin, kh, kw), jnp.float32) * jnp.sqrt(2.0 / fan_in)
    gamma = jnp.ones((cout,), jnp.float32)
    beta = jnp.zeros((cout,), jnp.float32)
    mean = jnp.zeros((cout,), jnp.float32)
    var = jnp.ones((cout,), jnp.float32)
    scale = gamma / jnp.sqrt(var + BN_EPS)
    bias = beta - mean * scale
    K = kh * kw * cin
    _, Kp, _, _, Np = _kn_tiles(K, cout)              # M-independent by construction
    wmat = jnp.transpose(w, (2, 3, 1, 0)).reshape(K, cout) * scale[None, :]
    wmat = jnp.pad(wmat, ((0, Kp - K), (0, Np - cout))).astype(jnp.bfloat16)
    bvec = jnp.pad(bias, (0, Np - cout)).reshape(1, Np).astype(jnp.float32)
    return {"w": wmat, "b": bvec}, ConvCfg(kh, kw, stride, pad, cin, cout)


def make_resnet50(key):
    keys = iter(jax.random.split(key, 256))
    stem_w, stem_c = _conv_params(next(keys), 3, 64, 7, 7, 2, 3)
    weights = {"stem": stem_w, "layers": []}
    cfgs = {"stem": stem_c, "layers": []}
    inplanes = 64
    for planes, nblocks, stride in [(64, 3, 1), (128, 4, 2), (256, 6, 2), (512, 3, 2)]:
        lw, lc = [], []
        for b in range(nblocks):
            s = stride if b == 0 else 1
            bw, bc = {}, {}
            bw["conv1"], bc["conv1"] = _conv_params(next(keys), inplanes, planes, 1, 1, 1, 0)
            bw["conv2"], bc["conv2"] = _conv_params(next(keys), planes, planes, 3, 3, s, 1)
            bw["conv3"], bc["conv3"] = _conv_params(next(keys), planes, planes * 4, 1, 1, 1, 0)
            if b == 0:
                bw["down"], bc["down"] = _conv_params(next(keys), inplanes, planes * 4, 1, 1, s, 0)
            lw.append(bw)
            lc.append(bc)
            inplanes = planes * 4
        weights["layers"].append(lw)
        cfgs["layers"].append(lc)
    return weights, cfgs


# ----------------------------------------------------------------------------- forward
def resnet_feature_extractor(x_nchw, weights, cfgs):
    x = jnp.transpose(x_nchw, (0, 2, 3, 1)).astype(jnp.bfloat16)   # NCHW -> NHWC bf16
    x = conv_bn_act(x, weights["stem"]["w"], weights["stem"]["b"], None,
                    cfg=cfgs["stem"], relu=True)
    x = maxpool3x3_s2(x)
    for lw, lc in zip(weights["layers"], cfgs["layers"]):
        for bw, bc in zip(lw, lc):
            identity = x
            out = conv_bn_act(x, bw["conv1"]["w"], bw["conv1"]["b"], None,
                              cfg=bc["conv1"], relu=True)
            out = conv_bn_act(out, bw["conv2"]["w"], bw["conv2"]["b"], None,
                              cfg=bc["conv2"], relu=True)
            if "down" in bw:
                identity = conv_bn_act(x, bw["down"]["w"], bw["down"]["b"], None,
                                       cfg=bc["down"], relu=False)
            # conv3 + BN + residual add + ReLU fused into one Pallas epilogue
            x = conv_bn_act(out, bw["conv3"]["w"], bw["conv3"]["b"], identity,
                            cfg=bc["conv3"], relu=True)
    feat = global_avgpool(x)            # (N, 2048) float32
    return feat[:, :, None, None]       # (N, 2048, 1, 1), matches nn.AdaptiveAvgPool2d((1,1))


# ----------------------------------------------------------------------------- main
if __name__ == "__main__":
    key = jax.random.PRNGKey(0)
    k_in, k_par = jax.random.split(key)

    # Small, ResNet-compatible input: batch=2, 3 channels, 32x32 spatial.
    x = jax.random.normal(k_in, (2, 3, 32, 32), jnp.float32)

    weights, cfgs = make_resnet50(k_par)
    out = resnet_feature_extractor(x, weights, cfgs)
    out = jax.block_until_ready(out)

    assert out.shape == (2, 2048, 1, 1), out.shape
    assert bool(jnp.all(jnp.isfinite(out)))
    print("KERNEL_OK")
</pallas_src>

<mosaic_0001>
module attributes {stable_mosaic.version = 11 : i64} {
  func.func @_mm_kernel(%arg0: i32, %arg1: i32, %arg2: memref<256x256xbf16, #tpu.memory_space<vmem>>, %arg3: memref<256x128xbf16, #tpu.memory_space<vmem>>, %arg4: memref<1x128xf32, #tpu.memory_space<vmem>>, %arg5: memref<256x128xbf16, #tpu.memory_space<vmem>>) attributes {dimension_semantics = [#tpu.dimension_semantics<parallel>, #tpu.dimension_semantics<parallel>], iteration_bounds = array<i64: 2, 1>, scalar_prefetch = 0 : i64, scratch_operands = 0 : i64, tpu.core_type = #tpu.core_type<tc>, window_params = [{transform_indices = @transform_0, window_bounds = array<i64: 256, 256>}, {transform_indices = @transform_1, window_bounds = array<i64: 256, 128>}, {transform_indices = @transform_2, window_bounds = array<i64: 1, 128>}, {transform_indices = @transform_3, window_bounds = array<i64: 256, 128>}]} {
    %c0 = arith.constant 0 : index
    %c0_0 = arith.constant 0 : index
    %0 = vector.load %arg2[%c0, %c0_0] : memref<256x256xbf16, #tpu.memory_space<vmem>>, vector<256x256xbf16>
    %c0_1 = arith.constant 0 : index
    %c0_2 = arith.constant 0 : index
    %1 = vector.load %arg3[%c0_1, %c0_2] : memref<256x128xbf16, #tpu.memory_space<vmem>>, vector<256x128xbf16>
    %cst = arith.constant dense<0.000000e+00> : vector<256x128xf32>
    %2 = tpu.matmul %0, %1, %cst {dimension_numbers = #tpu.dot_dimension_numbers<[1], [0], [0], [1], [0, 0, 1, 1], [], []>} : vector<256x256xbf16>, vector<256x128xbf16>, vector<256x128xf32> -> vector<256x128xf32>
    %c0_3 = arith.constant 0 : index
    %c0_4 = arith.constant 0 : index
    %3 = vector.load %arg4[%c0_3, %c0_4] : memref<1x128xf32, #tpu.memory_space<vmem>>, vector<1x128xf32>
    %4 = vector.broadcast %3 : vector<1x128xf32> to vector<256x128xf32>
    %5 = arith.addf %2, %4 : vector<256x128xf32>
    %cst_5 = arith.constant 0.000000e+00 : f32
    %6 = vector.broadcast %cst_5 : f32 to vector<256x128xf32>
    %7 = arith.maximumf %5, %6 : vector<256x128xf32>
    %8 = arith.truncf %7 : vector<256x128xf32> to vector<256x128xbf16>
    %c0_6 = arith.constant 0 : index
    %c0_7 = arith.constant 0 : index
    %9 = vector.load %arg5[%c0_6, %c0_7] : memref<256x128xbf16, #tpu.memory_space<vmem>>, vector<256x128xbf16>
    tpu.vector_store %arg5[%c0_6, %c0_7], %8 {strides = array<i32>} : memref<256x128xbf16, #tpu.memory_space<vmem>>, vector<256x128xbf16>,
    return
  }
  func.func @transform_0(%arg0: i32, %arg1: i32) -> (i32, i32) {
    %c0_i32 = arith.constant 0 : i32
    %c0_i32_0 = arith.constant 0 : i32
    return %arg0, %c0_i32 : i32, i32
  }
  func.func @transform_1(%arg0: i32, %arg1: i32) -> (i32, i32) {
    %c0_i32 = arith.constant 0 : i32
    %c0_i32_0 = arith.constant 0 : i32
    return %c0_i32, %arg1 : i32, i32
  }
  func.func @transform_2(%arg0: i32, %arg1: i32) -> (i32, i32) {
    %c0_i32 = arith.constant 0 : i32
    %c0_i32_0 = arith.constant 0 : i32
    return %c0_i32, %arg1 : i32, i32
  }
  func.func @transform_3(%arg0: i32, %arg1: i32) -> (i32, i32) {
    %c0_i32 = arith.constant 0 : i32
    return %arg0, %arg1 : i32, i32
  }
}

</mosaic_0001>

<llo_original>
// kernel: conv_bn_act.1
$region0: #{conv_bn_act.1}
  #allocation0 [shape = 'u32[]', space=smem, size = 0x4, offset = 0x4, fixed_abs, tag = 'smem constant byte address 0x4 - core index']
  #allocation1 [shape = 'u32[144,128]{1,0:T(1,128)}', space=vmem, size = 0x12000, scoped, tag = 'internal scratch']
  %s0 = inlined_call_operand.vmem [shape: bf16[512,256], index: 0, kind: input, shape index: {}]
  %s1 = inlined_call_operand.vmem [shape: bf16[256,128], index: 1, kind: input, shape index: {}]
  %s2 = inlined_call_operand.vmem [shape: f32[1,128], index: 2, kind: input, shape index: {}]
  %s3 = inlined_call_operand.hbm [shape: bf16[512,128], index: 3, kind: output, shape index: {}]
  %s4 = sld [smem:[#allocation0]]
  $region45: #{conv_bn_act.1} parent=0
    _
  %s6 = ssub.s32 1, %s4
  %s7 = scalar_select 0, %s6, %s4
  $region1: #{conv_bn_act.1} parent=0
    #allocation2 [shape = 'u8[131072]{0}', space=vmem, size = 0x20000, scoped, tag = 'output window, operand 0']
    #allocation3 [shape = 's32[2]{0}', space=sflag, size = 0x8, scoped, tag = 'scoped memory for conv_bn_act.1']
    %8 = vsyncpa [#allocation3], 0
    %s9 = scalar_lea.sflag [#allocation3], 1
    %10 = vsyncpa %s9, 0
    loop: start=0, step=1, limit=4
    $region2: #{conv_bn_act.1} parent=1 // loop_pre_header
      _
    $region3: #{conv_bn_act.1} parent=1 // loop_header
      %s12 = sphi 0, %s16
      %p13 = scmp.ge.s32.totalorder %s12, 4
      %s19 = sphi 0, %s31
      %s20 = sphi 0, %s27
      %s21 = sphi 0, %s19
      %s22 = sphi 0, %s20
      %s23 = sphi 0, %s21
      %s24 = sphi 0, %s22
      %s34 = sphi 0, %s36
      %s37 = sphi 0, %s34
      %s38 = sphi 0, %s37
      %s54 = sphi 0, %s38
      %s60 = sphi 0, %s62
      %s63 = sphi 0, %s60
      %s64 = sphi 0, %s63
      %s80 = sphi 0, %s64
      %s86 = sphi 0, %s88
      %s89 = sphi 0, %s86
      %s90 = sphi 0, %s89
      %s106 = sphi 0, %s90
      %s114 = sphi 0, %s116
      %s117 = sphi 0, %s114
      %s118 = sphi 0, %s117
      %s134 = sphi 0, %s118
    $region4: #{conv_bn_act.1} parent=1 // loop_header_branch
      %15 = sbr.rel (%p13) target = $region8
    $region5: #{conv_bn_act.1} parent=1 // loop_body
      %s17 = ssub.s32 %s12, 1
      %s18 = ssub.s32 %s12, 2
      %s25 = sadd.s32 1, %s20
      %p26 = scmp.ge.s32.totalorder %s25, 1
      %s27 = scalar_select %p26, 0, %s25
      %s28 = sadd.s32 1, %s19
      %s29 = scalar_select %p26, %s28, %s19
      %p30 = scmp.ge.s32.totalorder %s29, 2
      %s31 = scalar_select %p30, 0, %s29
      %s32 = ssub.s32 %s19, %s31
      %p33 = scmp.eq.s32.totalorder %s32, 0
      %s35 = sadd.s32 %s34, 1
      %s36 = scalar_select %p33, %s34, %s35
      %p39 = pneg %p33
      %p40 = scmp.eq.s32.totalorder %s12, 1
      %p41 = por %p39, %p40
      %p42 = scmp.ne.s32.totalorder %s34, %s37
      %p43 = scmp.eq.s32.totalorder %s12, 0
      %p44 = por %p42, %p43
      %p45 = scmp.ne.s32.totalorder %s34, %s37
      %p46 = scmp.eq.s32.totalorder %s17, 1
      %p47 = por %p45, %p46
      %p48 = scmp.ne.s32.totalorder %s37, %s38
      %p49 = scmp.eq.s32.totalorder %s17, 0
      %p50 = por %p48, %p49
      %p51 = scmp.ne.s32.totalorder %s37, %s38
      %p52 = scmp.eq.s32.totalorder %s18, 1
      %p53 = por %p51, %p52
      %p55 = scmp.ne.s32.totalorder %s38, %s54
      %p56 = scmp.eq.s32.totalorder %s18, 0
      %p57 = por %p55, %p56
      %s58 = ssub.s32 %s20, %s27
      %p59 = scmp.eq.s32.totalorder %s58, 0
      %s61 = sadd.s32 %s60, 1
      %s62 = scalar_select %p59, %s60, %s61
      %p65 = pneg %p59
      %p66 = scmp.eq.s32.totalorder %s12, 1
      %p67 = por %p65, %p66
      %p68 = scmp.ne.s32.totalorder %s60, %s63
      %p69 = scmp.eq.s32.totalorder %s12, 0
      %p70 = por %p68, %p69
      %p71 = scmp.ne.s32.totalorder %s60, %s63
      %p72 = scmp.eq.s32.totalorder %s17, 1
      %p73 = por %p71, %p72
      %p74 = scmp.ne.s32.totalorder %s63, %s64
      %p75 = scmp.eq.s32.totalorder %s17, 0
      %p76 = por %p74, %p75
      %p77 = scmp.ne.s32.totalorder %s63, %s64
      %p78 = scmp.eq.s32.totalorder %s18, 1
      %p79 = por %p77, %p78
      %p81 = scmp.ne.s32.totalorder %s64, %s80
      %p82 = scmp.eq.s32.totalorder %s18, 0
      %p83 = por %p81, %p82
      %s84 = ssub.s32 %s20, %s27
      %p85 = scmp.eq.s32.totalorder %s84, 0
      %s87 = sadd.s32 %s86, 1
      %s88 = scalar_select %p85, %s86, %s87
      %p91 = pneg %p85
      %p92 = scmp.eq.s32.totalorder %s12, 1
      %p93 = por %p91, %p92
      %p94 = scmp.ne.s32.totalorder %s86, %s89
      %p95 = scmp.eq.s32.totalorder %s12, 0
      %p96 = por %p94, %p95
      %p97 = scmp.ne.s32.totalorder %s86, %s89
      %p98 = scmp.eq.s32.totalorder %s17, 1
      %p99 = por %p97, %p98
      %p100 = scmp.ne.s32.totalorder %s89, %s90
      %p101 = scmp.eq.s32.totalorder %s17, 0
      %p102 = por %p100, %p101
      %p103 = scmp.ne.s32.totalorder %s89, %s90
      %p104 = scmp.eq.s32.totalorder %s18, 1
      %p105 = por %p103, %p104
      %p107 = scmp.ne.s32.totalorder %s90, %s106
      %p108 = scmp.eq.s32.totalorder %s18, 0
      %p109 = por %p107, %p108
      %s110 = ssub.s32 %s19, %s31
      %s111 = ssub.s32 %s20, %s27
      %s112 = sor.u32 %s110, %s111
      %p113 = scmp.eq.s32.totalorder %s112, 0
      %s115 = sadd.s32 %s114, 1
      %s116 = scalar_select %p113, %s114, %s115
      %p119 = pneg %p113
      %p120 = scmp.eq.s32.totalorder %s12, 1
      %p121 = por %p119, %p120
      %p122 = scmp.ne.s32.totalorder %s114, %s117
      %p123 = scmp.eq.s32.totalorder %s12, 0
      %p124 = por %p122, %p123
      %p125 = scmp.ne.s32.totalorder %s114, %s117
      %p126 = scmp.eq.s32.totalorder %s17, 1
      %p127 = por %p125, %p126
      %p128 = scmp.ne.s32.totalorder %s117, %s118
      %p129 = scmp.eq.s32.totalorder %s17, 0
      %p130 = por %p128, %p129
      %p131 = scmp.ne.s32.totalorder %s117, %s118
      %p132 = scmp.eq.s32.totalorder %s18, 1
      %p133 = por %p131, %p132
      %p135 = scmp.ne.s32.totalorder %s118, %s134
      %p136 = scmp.eq.s32.totalorder %s18, 0
      %p137 = por %p135, %p136
      %p138 = scmp.le.s32.totalorder 1, %s12
      %p139 = scmp.lt.s32.totalorder %s12, 3
      %p140 = pnand %p138, %p139
      %p141 = pneg %p140
      // Predicated region
      $region9: #{conv_bn_act.1} parent=5 // pred_check
        _
      $region10: #{conv_bn_act.1} parent=5 // pred_check_branch
        %143 = sbr.rel (%p140) target = $region12
      $region11: #{conv_bn_act.1} parent=5 // pred_region
        %s144 = ssub.s32 %s12, 1
        // Predicated region
        $region13: #{conv_bn_act.1} parent=11 // pred_check
          %p145 = pneg %p76
        $region14: #{conv_bn_act.1} parent=11 // pred_check_branch
          %147 = sbr.rel (%p145) target = $region16
        $region15: #{conv_bn_act.1} parent=11 // pred_region
          %p148 = scmp.lt.s32.totalorder %s22, 0
          %s149 = scalar_select %p148, %s22, 0
          %s150 = smul.addr %s149, 4
          %s151 = scalar_lea.vmem %s1, %s150
        $region16: #{conv_bn_act.1} parent=11 // pred_fallthru
          _
        // Predicated region
        $region17: #{conv_bn_act.1} parent=11 // pred_check
          %p152 = pneg %p102
        $region18: #{conv_bn_act.1} parent=11 // pred_check_branch
          %154 = sbr.rel (%p152) target = $region20
        $region19: #{conv_bn_act.1} parent=11 // pred_region
          %p155 = scmp.lt.s32.totalorder %s22, 0
          %s156 = scalar_select %p155, %s22, 0
          %s157 = scalar_lea.vmem %s2, %s156
        $region20: #{conv_bn_act.1} parent=11 // pred_fallthru
          _
      $region12: #{conv_bn_act.1} parent=5 // pred_fallthru
        _
      %p158 = scmp.lt.s32.totalorder %s12, 2
      // Predicated region
      $region21: #{conv_bn_act.1} parent=5 // pred_check
        %p159 = pneg %p158
      $region22: #{conv_bn_act.1} parent=5 // pred_check_branch
        %161 = sbr.rel (%p159) target = $region24
      $region23: #{conv_bn_act.1} parent=5 // pred_region
        // Predicated region
        $region25: #{conv_bn_act.1} parent=23 // pred_check
          %p162 = pneg %p44
        $region26: #{conv_bn_act.1} parent=23 // pred_check_branch
          %164 = sbr.rel (%p162) target = $region28
        $region27: #{conv_bn_act.1} parent=23 // pred_region
          %s165 = smul.u32 32, %s19
          %p166 = scmp.lt.s32.totalorder %s165, 63
          %s167 = scalar_select %p166, %s165, 63
          %s168 = smul.addr %s167, 2
          %s169 = smul.addr %s168, 4
          %s170 = scalar_lea.vmem %s0, %s169
          %s171 = smul.u32 32, %s19
        $region28: #{conv_bn_act.1} parent=23 // pred_fallthru
          _
      $region24: #{conv_bn_act.1} parent=5 // pred_fallthru
        _
      %p172 = scmp.le.s32.totalorder 1, %s12
      %p173 = scmp.lt.s32.totalorder %s12, 3
      %p174 = pnand %p172, %p173
      %p175 = pneg %p174
      // Predicated region
      $region29: #{conv_bn_act.1} parent=5 // pred_check
        _
      $region30: #{conv_bn_act.1} parent=5 // pred_check_branch
        %177 = sbr.rel (%p174) target = $region32
      $region31: #{conv_bn_act.1} parent=5 // pred_region
        %s178 = ssub.s32 %s12, 1
        %s179 = smul.u32 32, %s21
        %p180 = scmp.lt.s32.totalorder %s179, 63
        %s181 = scalar_select %p180, %s179, 63
        %s182 = smul.addr %s181, 2
        %s183 = smul.addr %s182, 4
        %s184 = scalar_lea.vmem %s0, %s183
        %p185 = pneg %p50
        %p186 = pneg %p47
        %p187 = scmp.lt.s32.totalorder %s22, 0
        %s188 = scalar_select %p187, %s22, 0
        %s189 = smul.addr %s188, 4
        %s190 = scalar_lea.vmem %s1, %s189
        %p191 = pneg %p76
        %p192 = pneg %p73
        %p193 = scmp.lt.s32.totalorder %s22, 0
        %s194 = scalar_select %p193, %s22, 0
        %s195 = scalar_lea.vmem %s2, %s194
        %p196 = pneg %p102
        %p197 = pneg %p99
        %p198 = pneg %p130
        %p199 = pneg %p127
        %s200 = sand.u32 %s117, 1
        %s201 = scalar_lea.sflag [#allocation3], %s200
        %s202 = sand.u32 %s117, 1
        %s203 = smul.addr %s202, 128
        %s204 = scalar_lea.vmem [#allocation2], %s203
        %s205 = smul.u32 32, %s21
        %p206 = scmp.lt.s32.totalorder %s205, 63
        %s207 = scalar_select %p206, %s205, 63
        %s208 = smul.addr %s207, 2
        %s209 = smul.addr %s208, 4
        %s210 = scalar_lea.vmem %s0, %s209
        %s211 = smul.u32 32, %s21
        %p212 = scmp.lt.s32.totalorder %s22, 0
        %s213 = scalar_select %p212, %s22, 0
        %s214 = smul.addr %s213, 4
        %s215 = scalar_lea.vmem %s1, %s214
        %p216 = scmp.lt.s32.totalorder %s22, 0
        %s217 = scalar_select %p216, %s22, 0
        %s218 = scalar_lea.vmem %s2, %s217
        %s219 = smul.u32 32, %s21
        %v221 = vld [vmem:[%s210] sm:$0xff]
        %v222 = vld [vmem:[%s210 + $0x8] sm:$0xff]
        %v223 = vld [vmem:[%s210 + $0x10] sm:$0xff]
        %v224 = vld [vmem:[%s210 + $0x18] sm:$0xff]
        %v225 = vld [vmem:[%s210 + $0x20] sm:$0xff]
        %v226 = vld [vmem:[%s210 + $0x28] sm:$0xff]
        %v227 = vld [vmem:[%s210 + $0x30] sm:$0xff]
        %v228 = vld [vmem:[%s210 + $0x38] sm:$0xff]
        %v229 = vld [vmem:[%s210 + $0x40] sm:$0xff]
        %v230 = vld [vmem:[%s210 + $0x48] sm:$0xff]
        %v231 = vld [vmem:[%s210 + $0x50] sm:$0xff]
        %v232 = vld [vmem:[%s210 + $0x58] sm:$0xff]
        %v233 = vld [vmem:[%s210 + $0x60] sm:$0xff]
        %v234 = vld [vmem:[%s210 + $0x68] sm:$0xff]
        %v235 = vld [vmem:[%s210 + $0x70] sm:$0xff]
        %v236 = vld [vmem:[%s210 + $0x78] sm:$0xff]
        %v237 = vld [vmem:[%s210 + $0x80] sm:$0xff]
        %v238 = vld [vmem:[%s210 + $0x88] sm:$0xff]
        %v239 = vld [vmem:[%s210 + $0x90] sm:$0xff]
        %v240 = vld [vmem:[%s210 + $0x98] sm:$0xff]
        %v241 = vld [vmem:[%s210 + $0xa0] sm:$0xff]
        %v242 = vld [vmem:[%s210 + $0xa8] sm:$0xff]
        %v243 = vld [vmem:[%s210 + $0xb0] sm:$0xff]
        %v244 = vld [vmem:[%s210 + $0xb8] sm:$0xff]
        %v245 = vld [vmem:[%s210 + $0xc0] sm:$0xff]
        %v246 = vld [vmem:[%s210 + $0xc8] sm:$0xff]
        %v247 = vld [vmem:[%s210 + $0xd0] sm:$0xff]
        %v248 = vld [vmem:[%s210 + $0xd8] sm:$0xff]
        %v249 = vld [vmem:[%s210 + $0xe0] sm:$0xff]
        %v250 = vld [vmem:[%s210 + $0xe8] sm:$0xff]
        %v251 = vld [vmem:[%s210 + $0xf0] sm:$0xff]
        %v252 = vld [vmem:[%s210 + $0xf8] sm:$0xff]
        %v253 = vld [vmem:[%s215] sm:$0xf]
        %v254 = vld [vmem:[%s215 + $0x4] sm:$0xf]
        %v255 = vld [vmem:[%s215 + $0x8] sm:$0xf]
        %v256 = vld [vmem:[%s215 + $0xc] sm:$0xf]
        %v257 = vld [vmem:[%s215 + $0x10] sm:$0xf]
        %v258 = vld [vmem:[%s215 + $0x14] sm:$0xf]
        %v259 = vld [vmem:[%s215 + $0x18] sm:$0xf]
        %v260 = vld [vmem:[%s215 + $0x1c] sm:$0xf]
        %v261 = vld [vmem:[%s215 + $0x20] sm:$0xf]
        %v262 = vld [vmem:[%s215 + $0x24] sm:$0xf]
        %v263 = vld [vmem:[%s215 + $0x28] sm:$0xf]
        %v264 = vld [vmem:[%s215 + $0x2c] sm:$0xf]
        %v265 = vld [vmem:[%s215 + $0x30] sm:$0xf]
        %v266 = vld [vmem:[%s215 + $0x34] sm:$0xf]
        %v267 = vld [vmem:[%s215 + $0x38] sm:$0xf]
        %v268 = vld [vmem:[%s215 + $0x3c] sm:$0xf]
        %v269 = vld [vmem:[%s215 + $0x40] sm:$0xf]
        %v270 = vld [vmem:[%s215 + $0x44] sm:$0xf]
        %v271 = vld [vmem:[%s215 + $0x48] sm:$0xf]
        %v272 = vld [vmem:[%s215 + $0x4c] sm:$0xf]
        %v273 = vld [vmem:[%s215 + $0x50] sm:$0xf]
        %v274 = vld [vmem:[%s215 + $0x54] sm:$0xf]
        %v275 = vld [vmem:[%s215 + $0x58] sm:$0xf]
        %v276 = vld [vmem:[%s215 + $0x5c] sm:$0xf]
        %v277 = vld [vmem:[%s215 + $0x60] sm:$0xf]
        %v278 = vld [vmem:[%s215 + $0x64] sm:$0xf]
        %v279 = vld [vmem:[%s215 + $0x68] sm:$0xf]
        %v280 = vld [vmem:[%s215 + $0x6c] sm:$0xf]
        %v281 = vld [vmem:[%s215 + $0x70] sm:$0xf]
        %v282 = vld [vmem:[%s215 + $0x74] sm:$0xf]
        %v283 = vld [vmem:[%s215 + $0x78] sm:$0xf]
        %v284 = vld [vmem:[%s215 + $0x7c] sm:$0xf]
        %v285 = vld [vmem:[%s218] sm:$0x1]
        %v287 = vlaneseq
        %v288 = vshrl.u32 %v287, 7
        %v289 = vsub.s32 0, %v288
        %v290 = vrot.slane %v285, %v289
        %v324 = vunpack.c.l.b16 %v221
        %v325 = vunpack.c.h.b16 %v221
        %v326 = vunpack.c.l.b16 %v222
        %v327 = vunpack.c.h.b16 %v222
        %v328 = vunpack.c.l.b16 %v223
        %v329 = vunpack.c.h.b16 %v223
        %v330 = vunpack.c.l.b16 %v224
        %v331 = vunpack.c.h.b16 %v224
        %v332 = vunpack.c.l.b16 %v225
        %v333 = vunpack.c.h.b16 %v225
        %v334 = vunpack.c.l.b16 %v226
        %v335 = vunpack.c.h.b16 %v226
        %v336 = vunpack.c.l.b16 %v227
        %v337 = vunpack.c.h.b16 %v227
        %v338 = vunpack.c.l.b16 %v228
        %v339 = vunpack.c.h.b16 %v228
        %v340 = vunpack.c.l.b16 %v229
        %v341 = vunpack.c.h.b16 %v229
        %v342 = vunpack.c.l.b16 %v230
        %v343 = vunpack.c.h.b16 %v230
        %v344 = vunpack.c.l.b16 %v231
        %v345 = vunpack.c.h.b16 %v231
        %v346 = vunpack.c.l.b16 %v232
        %v347 = vunpack.c.h.b16 %v232
        %v348 = vunpack.c.l.b16 %v233
        %v349 = vunpack.c.h.b16 %v233
        %v350 = vunpack.c.l.b16 %v234
        %v351 = vunpack.c.h.b16 %v234
        %v352 = vunpack.c.l.b16 %v235
        %v353 = vunpack.c.h.b16 %v235
        %v354 = vunpack.c.l.b16 %v236
        %v355 = vunpack.c.h.b16 %v236
        %v356 = vunpack.c.l.b16 %v237
        %v357 = vunpack.c.h.b16 %v237
        %v358 = vunpack.c.l.b16 %v238
        %v359 = vunpack.c.h.b16 %v238
        %v360 = vunpack.c.l.b16 %v239
        %v361 = vunpack.c.h.b16 %v239
        %v362 = vunpack.c.l.b16 %v240
        %v363 = vunpack.c.h.b16 %v240
        %v364 = vunpack.c.l.b16 %v241
        %v365 = vunpack.c.h.b16 %v241
        %v366 = vunpack.c.l.b16 %v242
        %v367 = vunpack.c.h.b16 %v242
        %v368 = vunpack.c.l.b16 %v243
        %v369 = vunpack.c.h.b16 %v243
        %v370 = vunpack.c.l.b16 %v244
        %v371 = vunpack.c.h.b16 %v244
        %v372 = vunpack.c.l.b16 %v245
        %v373 = vunpack.c.h.b16 %v245
        %v374 = vunpack.c.l.b16 %v246
        %v375 = vunpack.c.h.b16 %v246
        %v376 = vunpack.c.l.b16 %v247
        %v377 = vunpack.c.h.b16 %v247
        %v378 = vunpack.c.l.b16 %v248
        %v379 = vunpack.c.h.b16 %v248
        %v380 = vunpack.c.l.b16 %v249
        %v381 = vunpack.c.h.b16 %v249
        %v382 = vunpack.c.l.b16 %v250
        %v383 = vunpack.c.h.b16 %v250
        %v384 = vunpack.c.l.b16 %v251
        %v385 = vunpack.c.h.b16 %v251
        %v386 = vunpack.c.l.b16 %v252
        %v387 = vunpack.c.h.b16 %v252
        %v388 = vpack.c.b16 %v326, %v324
        %v389 = vpack.c.b16 %v327, %v325
        %v390 = vpack.c.b16 %v330, %v328
        %v391 = vpack.c.b16 %v331, %v329
        %v392 = vpack.c.b16 %v334, %v332
        %v393 = vpack.c.b16 %v335, %v333
        %v394 = vpack.c.b16 %v338, %v336
        %v395 = vpack.c.b16 %v339, %v337
        %v396 = vpack.c.b16 %v342, %v340
        %v397 = vpack.c.b16 %v343, %v341
        %v398 = vpack.c.b16 %v346, %v344
        %v399 = vpack.c.b16 %v347, %v345
        %v400 = vpack.c.b16 %v350, %v348
        %v401 = vpack.c.b16 %v351, %v349
        %v402 = vpack.c.b16 %v354, %v352
        %v403 = vpack.c.b16 %v355, %v353
        %v404 = vpack.c.b16 %v358, %v356
        %v405 = vpack.c.b16 %v359, %v357
        %v406 = vpack.c.b16 %v362, %v360
        %v407 = vpack.c.b16 %v363, %v361
        %v408 = vpack.c.b16 %v366, %v364
        %v409 = vpack.c.b16 %v367, %v365
        %v410 = vpack.c.b16 %v370, %v368
        %v411 = vpack.c.b16 %v371, %v369
        %v412 = vpack.c.b16 %v374, %v372
        %v413 = vpack.c.b16 %v375, %v373
        %v414 = vpack.c.b16 %v378, %v376
        %v415 = vpack.c.b16 %v379, %v377
        %v416 = vpack.c.b16 %v382, %v380
        %v417 = vpack.c.b16 %v383, %v381
        %v418 = vpack.c.b16 %v386, %v384
        %v419 = vpack.c.b16 %v387, %v385
        %v484 = vunpack.c.l.b16 %v253
        %v485 = vunpack.c.l.b16 %v254
        %v486 = vunpack.c.l.b16 %v255
        %v487 = vunpack.c.l.b16 %v256
        %v488 = vunpack.c.l.b16 %v257
        %v489 = vunpack.c.l.b16 %v258
        %v490 = vunpack.c.l.b16 %v259
        %v491 = vunpack.c.l.b16 %v260
        %v492 = vunpack.c.l.b16 %v261
        %v493 = vunpack.c.l.b16 %v262
        %v494 = vunpack.c.l.b16 %v263
        %v495 = vunpack.c.l.b16 %v264
        %v496 = vunpack.c.l.b16 %v265
        %v497 = vunpack.c.l.b16 %v266
        %v498 = vunpack.c.l.b16 %v267
        %v499 = vunpack.c.l.b16 %v268
        %v500 = vunpack.c.l.b16 %v269
        %v501 = vunpack.c.l.b16 %v270
        %v502 = vunpack.c.l.b16 %v271
        %v503 = vunpack.c.l.b16 %v272
        %v504 = vunpack.c.l.b16 %v273
        %v505 = vunpack.c.l.b16 %v274
        %v506 = vunpack.c.l.b16 %v275
        %v507 = vunpack.c.l.b16 %v276
        %v508 = vunpack.c.l.b16 %v277
        %v509 = vunpack.c.l.b16 %v278
        %v510 = vunpack.c.l.b16 %v279
        %v511 = vunpack.c.l.b16 %v280
        %v512 = vunpack.c.l.b16 %v281
        %v513 = vunpack.c.l.b16 %v282
        %v514 = vunpack.c.l.b16 %v283
        %v515 = vunpack.c.l.b16 %v284
        %v516 = vpack.c.b16 %v485, %v484
        %v517 = vpack.c.b16 %v487, %v486
        %v518 = vpack.c.b16 %v489, %v488
        %v519 = vpack.c.b16 %v491, %v490
        %v520 = vpack.c.b16 %v493, %v492
        %v521 = vpack.c.b16 %v495, %v494
        %v522 = vpack.c.b16 %v497, %v496
        %v523 = vpack.c.b16 %v499, %v498
        %v524 = vpack.c.b16 %v501, %v500
        %v525 = vpack.c.b16 %v503, %v502
        %v526 = vpack.c.b16 %v505, %v504
        %v527 = vpack.c.b16 %v507, %v506
        %v528 = vpack.c.b16 %v509, %v508
        %v529 = vpack.c.b16 %v511, %v510
        %v530 = vpack.c.b16 %v513, %v512
        %v531 = vpack.c.b16 %v515, %v514
        %548 = vmatprep.subr.bf16.mxu0 0
        %549 = vmatpush1.bf16.msra.mxu0 %v523
        %550 = vmatprep.subr.bf16.mxu0 0
        %551 = vmatpush1.bf16.msra.mxu0 %v522
        %552 = vmatprep.subr.bf16.mxu0 0
        %553 = vmatpush1.bf16.msra.mxu0 %v521
        %554 = vmatprep.subr.bf16.mxu0 0
        %555 = vmatpush1.bf16.msra.mxu0 %v520
        %556 = vmatprep.subr.bf16.mxu0 0
        %557 = vmatpush1.bf16.msra.mxu0 %v519
        %558 = vmatprep.subr.bf16.mxu0 0
        %559 = vmatpush1.bf16.msra.mxu0 %v518
        %560 = vmatprep.subr.bf16.mxu0 0
        %561 = vmatpush1.bf16.msra.mxu0 %v517
        %562 = vmatprep.subr.bf16.mxu0 0
        %563 = vmatpush1.bf16.msra.mxu0 %v516
        %564 = vmatprep.subr.bf16.mxu0 0
        %565 = vmatpush2.bf16.msra.mxu0 %v531
        %566 = vmatprep.subr.bf16.mxu0 0
        %567 = vmatpush2.bf16.msra.mxu0 %v530
        %568 = vmatprep.subr.bf16.mxu0 0
        %569 = vmatpush2.bf16.msra.mxu0 %v529
        %570 = vmatprep.subr.bf16.mxu0 0
        %571 = vmatpush2.bf16.msra.mxu0 %v528
        %572 = vmatprep.subr.bf16.mxu0 0
        %573 = vmatpush2.bf16.msra.mxu0 %v527
        %574 = vmatprep.subr.bf16.mxu0 0
        %575 = vmatpush2.bf16.msra.mxu0 %v526
        %576 = vmatprep.subr.bf16.mxu0 0
        %577 = vmatpush2.bf16.msra.mxu0 %v525
        %578 = vmatprep.subr.bf16.mxu0 0
        %579 = vmatpush2.bf16.msra.mxu0 %v524
        %580 = vmatprep.mubr.bf16.mxu0 %v389
        %581 = vmatmul.mubr.bf16.gmra.mxu0 %v388
        %v582 = vpop.f32.mrf.mxu0
        %v583 = vadd.f32 %v290, %v582
        %v584 = vpop.f32.mrf.mxu0
        %v585 = vpop.f32.mrf.mxu0
        %v586 = vadd.f32 %v290, %v585
        %v587 = vpop.f32.mrf.mxu0
        %588 = vmatprep.mubr.bf16.mxu0 %v391
        %589 = vmatmul.mubr.bf16.gmra.mxu0 %v390
        %v590 = vpop.f32.mrf.mxu0
        %v591 = vadd.f32 %v290, %v590
        %v592 = vpop.f32.mrf.mxu0
        %v593 = vpop.f32.mrf.mxu0
        %v594 = vadd.f32 %v290, %v593
        %v595 = vpop.f32.mrf.mxu0
        %596 = vmatprep.mubr.bf16.mxu0 %v393
        %597 = vmatmul.mubr.bf16.gmra.mxu0 %v392
        %v598 = vpop.f32.mrf.mxu0
        %v599 = vadd.f32 %v290, %v598
        %v600 = vpop.f32.mrf.mxu0
        %v601 = vpop.f32.mrf.mxu0
        %v602 = vadd.f32 %v290, %v601
        %v603 = vpop.f32.mrf.mxu0
        %604 = vmatprep.mubr.bf16.mxu0 %v395
        %605 = vmatmul.mubr.bf16.gmra.mxu0 %v394
        %v606 = vpop.f32.mrf.mxu0
        %v607 = vadd.f32 %v290, %v606
        %v608 = vpop.f32.mrf.mxu0
        %v609 = vpop.f32.mrf.mxu0
        %v610 = vadd.f32 %v290, %v609
        %v611 = vpop.f32.mrf.mxu0
        %612 = vmatprep.mubr.bf16.mxu0 %v397
        %613 = vmatmul.mubr.bf16.gmra.mxu0 %v396
        %v614 = vpop.f32.mrf.mxu0
        %v615 = vadd.f32 %v290, %v614
        %v616 = vpop.f32.mrf.mxu0
        %v617 = vpop.f32.mrf.mxu0
        %v618 = vadd.f32 %v290, %v617
        %v619 = vpop.f32.mrf.mxu0
        %620 = vmatprep.mubr.bf16.mxu0 %v399
        %621 = vmatmul.mubr.bf16.gmra.mxu0 %v398
        %v622 = vpop.f32.mrf.mxu0
        %v623 = vadd.f32 %v290, %v622
        %v624 = vpop.f32.mrf.mxu0
        %v625 = vpop.f32.mrf.mxu0
        %v626 = vadd.f32 %v290, %v625
        %v627 = vpop.f32.mrf.mxu0
        %628 = vmatprep.mubr.bf16.mxu0 %v401
        %629 = vmatmul.mubr.bf16.gmra.mxu0 %v400
        %v630 = vpop.f32.mrf.mxu0
        %v631 = vadd.f32 %v290, %v630
        %v632 = vpop.f32.mrf.mxu0
        %v633 = vpop.f32.mrf.mxu0
        %v634 = vadd.f32 %v290, %v633
        %v635 = vpop.f32.mrf.mxu0
        %636 = vmatprep.mubr.bf16.mxu0 %v403
        %637 = vmatmul.mubr.bf16.gmra.mxu0 %v402
        %v638 = vpop.f32.mrf.mxu0
        %v639 = vadd.f32 %v290, %v638
        %v640 = vpop.f32.mrf.mxu0
        %v641 = vpop.f32.mrf.mxu0
        %v642 = vadd.f32 %v290, %v641
        %v643 = vpop.f32.mrf.mxu0
        %644 = vmatprep.mubr.bf16.mxu0 %v405
        %645 = vmatmul.mubr.bf16.gmra.mxu0 %v404
        %v646 = vpop.f32.mrf.mxu0
        %v647 = vadd.f32 %v290, %v646
        %v648 = vpop.f32.mrf.mxu0
        %v649 = vpop.f32.mrf.mxu0
        %v650 = vadd.f32 %v290, %v649
        %v651 = vpop.f32.mrf.mxu0
        %652 = vmatprep.mubr.bf16.mxu0 %v407
        %653 = vmatmul.mubr.bf16.gmra.mxu0 %v406
        %v654 = vpop.f32.mrf.mxu0
        %v655 = vadd.f32 %v290, %v654
        %v656 = vpop.f32.mrf.mxu0
        %v657 = vpop.f32.mrf.mxu0
        %v658 = vadd.f32 %v290, %v657
        %v659 = vpop.f32.mrf.mxu0
        %660 = vmatprep.mubr.bf16.mxu0 %v409
        %661 = vmatmul.mubr.bf16.gmra.mxu0 %v408
        %v662 = vpop.f32.mrf.mxu0
        %v663 = vadd.f32 %v290, %v662
        %v664 = vpop.f32.mrf.mxu0
        %v665 = vpop.f32.mrf.mxu0
        %v666 = vadd.f32 %v290, %v665
        %v667 = vpop.f32.mrf.mxu0
        %668 = vmatprep.mubr.bf16.mxu0 %v411
        %669 = vmatmul.mubr.bf16.gmra.mxu0 %v410
        %v670 = vpop.f32.mrf.mxu0
        %v671 = vadd.f32 %v290, %v670
        %v672 = vpop.f32.mrf.mxu0
        %v673 = vpop.f32.mrf.mxu0
        %v674 = vadd.f32 %v290, %v673
        %v675 = vpop.f32.mrf.mxu0
        %676 = vmatprep.mubr.bf16.mxu0 %v413
        %677 = vmatmul.mubr.bf16.gmra.mxu0 %v412
        %v678 = vpop.f32.mrf.mxu0
        %v679 = vadd.f32 %v290, %v678
        %v680 = vpop.f32.mrf.mxu0
        %v681 = vpop.f32.mrf.mxu0
        %v682 = vadd.f32 %v290, %v681
        %v683 = vpop.f32.mrf.mxu0
        %684 = vmatprep.mubr.bf16.mxu0 %v415
        %685 = vmatmul.mubr.bf16.gmra.mxu0 %v414
        %v686 = vpop.f32.mrf.mxu0
        %v687 = vadd.f32 %v290, %v686
        %v688 = vpop.f32.mrf.mxu0
        %v689 = vpop.f32.mrf.mxu0
        %v690 = vadd.f32 %v290, %v689
        %v691 = vpop.f32.mrf.mxu0
        %692 = vmatprep.mubr.bf16.mxu0 %v417
        %693 = vmatmul.mubr.bf16.gmra.mxu0 %v416
        %v694 = vpop.f32.mrf.mxu0
        %v695 = vadd.f32 %v290, %v694
        %v696 = vpop.f32.mrf.mxu0
        %v697 = vpop.f32.mrf.mxu0
        %v698 = vadd.f32 %v290, %v697
        %v699 = vpop.f32.mrf.mxu0
        %700 = vmatprep.mubr.bf16.mxu0 %v419
        %701 = vmatmul.mubr.bf16.gmra.mxu0 %v418
        %v702 = vpop.f32.mrf.mxu0
        %v703 = vadd.f32 %v290, %v702
        %v704 = vpop.f32.mrf.mxu0
        %v705 = vpop.f32.mrf.mxu0
        %v706 = vadd.f32 %v290, %v705
        %v707 = vpop.f32.mrf.mxu0
        %708 = vdwg.mxu0
        %v709 = vmax.f32 %v583, 0.0
        %v710 = vmax.f32 %v586, 0.0
        %v711 = vmax.f32 %v591, 0.0
        %v712 = vmax.f32 %v594, 0.0
        %v713 = vmax.f32 %v599, 0.0
        %v714 = vmax.f32 %v602, 0.0
        %v715 = vmax.f32 %v607, 0.0
        %v716 = vmax.f32 %v610, 0.0
        %v717 = vmax.f32 %v615, 0.0
        %v718 = vmax.f32 %v618, 0.0
        %v719 = vmax.f32 %v623, 0.0
        %v720 = vmax.f32 %v626, 0.0
        %v721 = vmax.f32 %v631, 0.0
        %v722 = vmax.f32 %v634, 0.0
        %v723 = vmax.f32 %v639, 0.0
        %v724 = vmax.f32 %v642, 0.0
        %v725 = vmax.f32 %v647, 0.0
        %v726 = vmax.f32 %v650, 0.0
        %v727 = vmax.f32 %v655, 0.0
        %v728 = vmax.f32 %v658, 0.0
        %v729 = vmax.f32 %v663, 0.0
        %v730 = vmax.f32 %v666, 0.0
        %v731 = vmax.f32 %v671, 0.0
        %v732 = vmax.f32 %v674, 0.0
        %v733 = vmax.f32 %v679, 0.0
        %v734 = vmax.f32 %v682, 0.0
        %v735 = vmax.f32 %v687, 0.0
        %v736 = vmax.f32 %v690, 0.0
        %v737 = vmax.f32 %v695, 0.0
        %v738 = vmax.f32 %v698, 0.0
        %v739 = vmax.f32 %v703, 0.0
        %v740 = vmax.f32 %v706, 0.0
        %v741 = vpack.c.bf16 %v710, %v709
        %v742 = vpack.c.bf16 %v712, %v711
        %v743 = vpack.c.bf16 %v714, %v713
        %v744 = vpack.c.bf16 %v716, %v715
        %v745 = vpack.c.bf16 %v718, %v717
        %v746 = vpack.c.bf16 %v720, %v719
        %v747 = vpack.c.bf16 %v722, %v721
        %v748 = vpack.c.bf16 %v724, %v723
        %v749 = vpack.c.bf16 %v726, %v725
        %v750 = vpack.c.bf16 %v728, %v727
        %v751 = vpack.c.bf16 %v730, %v729
        %v752 = vpack.c.bf16 %v732, %v731
        %v753 = vpack.c.bf16 %v734, %v733
        %v754 = vpack.c.bf16 %v736, %v735
        %v755 = vpack.c.bf16 %v738, %v737
        %v756 = vpack.c.bf16 %v740, %v739
        %v773 = vunpack.c.l.b16 %v741
        %v774 = vunpack.c.h.b16 %v741
        %v775 = vunpack.c.l.b16 %v742
        %v776 = vunpack.c.h.b16 %v742
        %v777 = vunpack.c.l.b16 %v743
        %v778 = vunpack.c.h.b16 %v743
        %v779 = vunpack.c.l.b16 %v744
        %v780 = vunpack.c.h.b16 %v744
        %v781 = vunpack.c.l.b16 %v745
        %v782 = vunpack.c.h.b16 %v745
        %v783 = vunpack.c.l.b16 %v746
        %v784 = vunpack.c.h.b16 %v746
        %v785 = vunpack.c.l.b16 %v747
        %v786 = vunpack.c.h.b16 %v747
        %v787 = vunpack.c.l.b16 %v748
        %v788 = vunpack.c.h.b16 %v748
        %v789 = vunpack.c.l.b16 %v749
        %v790 = vunpack.c.h.b16 %v749
        %v791 = vunpack.c.l.b16 %v750
        %v792 = vunpack.c.h.b16 %v750
        %v793 = vunpack.c.l.b16 %v751
        %v794 = vunpack.c.h.b16 %v751
        %v795 = vunpack.c.l.b16 %v752
        %v796 = vunpack.c.h.b16 %v752
        %v797 = vunpack.c.l.b16 %v753
        %v798 = vunpack.c.h.b16 %v753
        %v799 = vunpack.c.l.b16 %v754
        %v800 = vunpack.c.h.b16 %v754
        %v801 = vunpack.c.l.b16 %v755
        %v802 = vunpack.c.h.b16 %v755
        %v803 = vunpack.c.l.b16 %v756
        %v804 = vunpack.c.h.b16 %v756
        %v805 = vpack.c.b16 %v773, %v773
        %v806 = vpack.c.b16 %v774, %v774
        %v807 = vpack.c.b16 %v775, %v775
        %v808 = vpack.c.b16 %v776, %v776
        %v809 = vpack.c.b16 %v777, %v777
        %v810 = vpack.c.b16 %v778, %v778
        %v811 = vpack.c.b16 %v779, %v779
        %v812 = vpack.c.b16 %v780, %v780
        %v813 = vpack.c.b16 %v781, %v781
        %v814 = vpack.c.b16 %v782, %v782
        %v815 = vpack.c.b16 %v783, %v783
        %v816 = vpack.c.b16 %v784, %v784
        %v817 = vpack.c.b16 %v785, %v785
        %v818 = vpack.c.b16 %v786, %v786
        %v819 = vpack.c.b16 %v787, %v787
        %v820 = vpack.c.b16 %v788, %v788
        %v821 = vpack.c.b16 %v789, %v789
        %v822 = vpack.c.b16 %v790, %v790
        %v823 = vpack.c.b16 %v791, %v791
        %v824 = vpack.c.b16 %v792, %v792
        %v825 = vpack.c.b16 %v793, %v793
        %v826 = vpack.c.b16 %v794, %v794
        %v827 = vpack.c.b16 %v795, %v795
        %v828 = vpack.c.b16 %v796, %v796
        %v829 = vpack.c.b16 %v797, %v797
        %v830 = vpack.c.b16 %v798, %v798
        %v831 = vpack.c.b16 %v799, %v799
        %v832 = vpack.c.b16 %v800, %v800
        %v833 = vpack.c.b16 %v801, %v801
        %v834 = vpack.c.b16 %v802, %v802
        %v835 = vpack.c.b16 %v803, %v803
        %v836 = vpack.c.b16 %v804, %v804
        %869 = vst [vmem:[%s204] sm:$0xf] %v805
        %870 = vst [vmem:[%s204 + $0x4] sm:$0xf] %v806
        %871 = vst [vmem:[%s204 + $0x8] sm:$0xf] %v807
        %872 = vst [vmem:[%s204 + $0xc] sm:$0xf] %v808
        %873 = vst [vmem:[%s204 + $0x10] sm:$0xf] %v809
        %874 = vst [vmem:[%s204 + $0x14] sm:$0xf] %v810
        %875 = vst [vmem:[%s204 + $0x18] sm:$0xf] %v811
        %876 = vst [vmem:[%s204 + $0x1c] sm:$0xf] %v812
        %877 = vst [vmem:[%s204 + $0x20] sm:$0xf] %v813
        %878 = vst [vmem:[%s204 + $0x24] sm:$0xf] %v814
        %879 = vst [vmem:[%s204 + $0x28] sm:$0xf] %v815
        %880 = vst [vmem:[%s204 + $0x2c] sm:$0xf] %v816
        %881 = vst [vmem:[%s204 + $0x30] sm:$0xf] %v817
        %882 = vst [vmem:[%s204 + $0x34] sm:$0xf] %v818
        %883 = vst [vmem:[%s204 + $0x38] sm:$0xf] %v819
        %884 = vst [vmem:[%s204 + $0x3c] sm:$0xf] %v820
        %885 = vst [vmem:[%s204 + $0x40] sm:$0xf] %v821
        %886 = vst [vmem:[%s204 + $0x44] sm:$0xf] %v822
        %887 = vst [vmem:[%s204 + $0x48] sm:$0xf] %v823
        %888 = vst [vmem:[%s204 + $0x4c] sm:$0xf] %v824
        %889 = vst [vmem:[%s204 + $0x50] sm:$0xf] %v825
        %890 = vst [vmem:[%s204 + $0x54] sm:$0xf] %v826
        %891 = vst [vmem:[%s204 + $0x58] sm:$0xf] %v827
        %892 = vst [vmem:[%s204 + $0x5c] sm:$0xf] %v828
        %893 = vst [vmem:[%s204 + $0x60] sm:$0xf] %v829
        %894 = vst [vmem:[%s204 + $0x64] sm:$0xf] %v830
        %895 = vst [vmem:[%s204 + $0x68] sm:$0xf] %v831
        %896 = vst [vmem:[%s204 + $0x6c] sm:$0xf] %v832
        %897 = vst [vmem:[%s204 + $0x70] sm:$0xf] %v833
        %898 = vst [vmem:[%s204 + $0x74] sm:$0xf] %v834
        %899 = vst [vmem:[%s204 + $0x78] sm:$0xf] %v835
        %900 = vst [vmem:[%s204 + $0x7c] sm:$0xf] %v836
        %s901 = sand.u32 %s117, 1
        %s902 = scalar_lea.sflag [#allocation3], %s901
        %s903 = sand.u32 %s117, 1
        %s904 = smul.addr %s903, 128
        %s905 = scalar_lea.vmem [#allocation2], %s904
        // Predicated region
        $region33: #{conv_bn_act.1} parent=31 // pred_check
          %p906 = pneg %p127
        $region34: #{conv_bn_act.1} parent=31 // pred_check_branch
          %908 = sbr.rel (%p906) target = $region36
        $region35: #{conv_bn_act.1} parent=31 // pred_region
          %s909 = smul.u32 32, %s21
          %s911 = ssub.s32 2048, 2048
          %912 = vsyncadd %s902, %s911
          %s913 = sadd.s32 %s22, %s909
          %s914 = smul.addr %s913, 64
          %s915 = scalar_lea.hbm %s3, %s914
          %s916 = sshll.u32 %s905, 4
          %s917 = int_to_ptr.vmem [resolvable:$true] %s916
          %922 = dma.vmem_to_hbm [thread:$0]  %s917, 2048, %s915, %s902, 64, 64, 4
        $region36: #{conv_bn_act.1} parent=31 // pred_fallthru
          _
      $region32: #{conv_bn_act.1} parent=5 // pred_fallthru
        _
      %p923 = scmp.le.s32.totalorder 2, %s12
      // Predicated region
      $region37: #{conv_bn_act.1} parent=5 // pred_check
        %p924 = pneg %p923
      $region38: #{conv_bn_act.1} parent=5 // pred_check_branch
        %926 = sbr.rel (%p924) target = $region40
      $region39: #{conv_bn_act.1} parent=5 // pred_region
        %s927 = ssub.s32 %s12, 2
        // Predicated region
        $region41: #{conv_bn_act.1} parent=39 // pred_check
          %p928 = pneg %p133
        $region42: #{conv_bn_act.1} parent=39 // pred_check_branch
          %930 = sbr.rel (%p928) target = $region44
        $region43: #{conv_bn_act.1} parent=39 // pred_region
          %s931 = sand.u32 %s118, 1
          %s932 = scalar_lea.sflag [#allocation3], %s931
          %s933 = sand.u32 %s118, 1
          %s934 = smul.addr %s933, 128
          %s935 = scalar_lea.vmem [#allocation2], %s934
          %936 = dma.done %s932, 2048
        $region44: #{conv_bn_act.1} parent=39 // pred_fallthru
          _
      $region40: #{conv_bn_act.1} parent=5 // pred_fallthru
        _
    $region6: #{conv_bn_act.1} parent=1 // loop_footer
      %s16 = sadd.s32 1, %s12
    $region7: #{conv_bn_act.1} parent=1 // loop_footer_branch
      %11 = sbr.rel target = $region3
    $region8: #{conv_bn_act.1} parent=1 // loop_exit
      _
    %937 = vsyncpa [#allocation3], 1
    %s938 = scalar_lea.sflag [#allocation3], 1
    %939 = vsyncpa %s938, 1

</llo_original>
